<compile_context>
chip_gen: v5e
topology: v5e:2x2
jax: 0.10.0
libtpu: 0.0.40
codegen_flags: <defaults>
</compile_context>

<pallas_src>
import functools

import jax
import jax.numpy as jnp
from jax.experimental import pallas as pl
from jax.experimental.pallas import tpu as pltpu


def _round_up(x, m):
    return ((x + m - 1) // m) * m


def ffn_kernel(x_ref, w1_ref, b1_ref, w2_ref, b2_ref, o_ref, acc_ref):
    """One (row-tile i, hidden-chunk k) step of the fused FFN.

    x_ref  : (tm, emb_p)   native dtype (bf16/f32) -> full-rate MXU
    w1_ref : (emb_p, tk)
    b1_ref : (1, tk)
    w2_ref : (tk, emb_p)
    b2_ref : (1, emb_p)
    o_ref  : (tm, emb_p)   written on the last k step only
    acc_ref: (tm, emb_p)   f32 scratch accumulator, resident across the k axis
    """
    k = pl.program_id(1)

    @pl.when(k == 0)
    def _():
        acc_ref[...] = jnp.zeros_like(acc_ref)

    # First linear (this hidden chunk): native-dtype operands, f32 MXU accumulation.
    h = jnp.dot(x_ref[...], w1_ref[...], preferred_element_type=jnp.float32)
    h = h + b1_ref[...].astype(jnp.float32)

    # GELU, tanh approximation (matches the PyTorch GELU module), in f32:
    # 0.5 * x * (1 + tanh(sqrt(2/pi) * (x + 0.044715 * x^3)))
    c = jnp.float32(0.7978845608028654)  # sqrt(2/pi)
    g = 0.5 * h * (1.0 + jnp.tanh(c * (h + 0.044715 * (h * h * h))))

    # Second linear: accumulate this hidden chunk's contribution (f32 accumulator).
    acc_ref[...] += jnp.dot(g.astype(w2_ref.dtype), w2_ref[...],
                            preferred_element_type=jnp.float32)

    @pl.when(k == pl.num_programs(1) - 1)
    def _():
        o_ref[...] = (acc_ref[...] + b2_ref[...].astype(jnp.float32)).astype(o_ref.dtype)


def _pick_tiles(m, emb_p, hidden, itemsize, tm, tk, budget_bytes):
    """Clamp/shrink (tm, tk) so the double-buffered working set fits the budget."""
    tk = min(tk, _round_up(hidden, 128))
    tm = min(tm, _round_up(m, 8))

    def working_set(tm_, tk_):
        x_b = tm_ * emb_p * itemsize * 2          # x tile, double-buffered
        w1_b = emb_p * tk_ * itemsize * 2          # W1 chunk
        w2_b = tk_ * emb_p * itemsize * 2          # W2 chunk
        b_b = (tk_ + emb_p) * itemsize * 2         # b1 + b2 chunks
        o_b = tm_ * emb_p * itemsize * 2           # output tile
        acc_b = tm_ * emb_p * 4                    # f32 accumulator scratch
        return x_b + w1_b + w2_b + b_b + o_b + acc_b

    # Shrink the hidden chunk first (cheapest to shrink), then the row tile.
    while working_set(tm, tk) > budget_bytes and tk > 128:
        tk = max(128, tk // 2)
    while working_set(tm, tk) > budget_bytes and tm > 8:
        tm = max(8, _round_up(tm // 2, 8))
    return tm, tk


@functools.partial(jax.jit, static_argnames=("tm", "tk"))
def feed_forward(x, w1, b1, w2, b2, *, tm=256, tk=512):
    """x: (batch, seq, emb). w1: (emb, 4*emb), b1: (1, 4*emb),
    w2: (4*emb, emb), b2: (1, emb). Returns (batch, seq, emb)."""
    batch, seq, emb = x.shape
    hidden = w1.shape[1]
    m = batch * seq

    # Lane-dense padding: feature dims to multiples of 128.
    emb_p = _round_up(emb, 128)

    # Adaptive tile selection against a conservative VMEM working-set budget
    # (safe across v5e/v6e/v7x scoped-VMEM defaults).
    itemsize = jnp.dtype(x.dtype).itemsize
    budget = 24 * 1024 * 1024
    tm, tk = _pick_tiles(m, emb_p, hidden, itemsize, tm, tk, budget)

    hidden_p = _round_up(hidden, tk)
    m_p = _round_up(m, tm)

    # Zero-padding is mathematically inert (padded rows/cols contribute 0 and
    # are sliced off before returning).  jnp.pad with zero widths is a no-op.
    x2d = jnp.pad(x.reshape(m, emb), ((0, m_p - m), (0, emb_p - emb)))
    w1p = jnp.pad(w1, ((0, emb_p - emb), (0, hidden_p - hidden)))
    b1p = jnp.pad(b1, ((0, 0), (0, hidden_p - hidden)))
    w2p = jnp.pad(w2, ((0, hidden_p - hidden), (0, emb_p - emb)))
    b2p = jnp.pad(b2, ((0, 0), (0, emb_p - emb)))

    grid = (m_p // tm, hidden_p // tk)

    out2d = pl.pallas_call(
        ffn_kernel,
        out_shape=jax.ShapeDtypeStruct((m_p, emb_p), x.dtype),
        grid_spec=pltpu.PrefetchScalarGridSpec(
            num_scalar_prefetch=0,
            grid=grid,
            in_specs=[
                pl.BlockSpec((tm, emb_p), lambda i, k: (i, 0)),    # x row-tile
                pl.BlockSpec((emb_p, tk), lambda i, k: (0, k)),    # W1 hidden-chunk
                pl.BlockSpec((1, tk), lambda i, k: (0, k)),        # b1 chunk
                pl.BlockSpec((tk, emb_p), lambda i, k: (k, 0)),    # W2 hidden-chunk
                pl.BlockSpec((1, emb_p), lambda i, k: (0, 0)),     # b2
            ],
            out_specs=pl.BlockSpec((tm, emb_p), lambda i, k: (i, 0)),
            scratch_shapes=[pltpu.VMEM((tm, emb_p), jnp.float32)],
        ),
        compiler_params=pltpu.CompilerParams(
            dimension_semantics=("parallel", "arbitrary"),
            vmem_limit_bytes=48 * 1024 * 1024,
        ),
    )(x2d, w1p, b1p, w2p, b2p)

    return out2d[:m, :emb].reshape(batch, seq, emb)


def feed_forward_ref(x, w1, b1, w2, b2):
    """Pure-JAX reference (mirrors the PyTorch module)."""
    h = x @ w1 + b1[0]
    c = jnp.sqrt(2.0 / jnp.pi)
    g = 0.5 * h * (1.0 + jnp.tanh(c * (h + 0.044715 * h ** 3)))
    return g @ w2 + b2[0]


if __name__ == "__main__":
    # cfg = {'emb_dim': 32}  -> hidden = 4 * 32 = 128
    emb_dim = 32
    hidden = 4 * emb_dim
    batch, seq = 2, 8

    key = jax.random.PRNGKey(0)
    kx, kw1, kb1, kw2, kb2 = jax.random.split(key, 5)

    x = jax.random.normal(kx, (batch, seq, emb_dim), dtype=jnp.float32)
    # Deterministic parameter init (nn.Linear-style uniform bound).
    bound1 = 1.0 / jnp.sqrt(emb_dim)
    bound2 = 1.0 / jnp.sqrt(hidden)
    w1 = jax.random.uniform(kw1, (emb_dim, hidden), jnp.float32, -bound1, bound1)
    b1 = jax.random.uniform(kb1, (1, hidden), jnp.float32, -bound1, bound1)
    w2 = jax.random.uniform(kw2, (hidden, emb_dim), jnp.float32, -bound2, bound2)
    b2 = jax.random.uniform(kb2, (1, emb_dim), jnp.float32, -bound2, bound2)

    out = feed_forward(x, w1, b1, w2, b2)
    out = jax.block_until_ready(out)

    ref = feed_forward_ref(x, w1, b1, w2, b2)
    assert out.shape == (batch, seq, emb_dim)
    assert jnp.allclose(out, ref, atol=1e-5, rtol=1e-5), "mismatch vs reference"

    print("KERNEL_OK")
</pallas_src>

<mosaic_0001>
module attributes {stable_mosaic.version = 11 : i64} {
  func.func @ffn_kernel(%arg0: i32, %arg1: i32, %arg2: memref<16x128xf32, #tpu.memory_space<vmem>>, %arg3: memref<128x128xf32, #tpu.memory_space<vmem>>, %arg4: memref<1x128xf32, #tpu.memory_space<vmem>>, %arg5: memref<128x128xf32, #tpu.memory_space<vmem>>, %arg6: memref<1x128xf32, #tpu.memory_space<vmem>>, %arg7: memref<16x128xf32, #tpu.memory_space<vmem>>, %arg8: memref<16x128xf32, #tpu.memory_space<vmem>>) attributes {dimension_semantics = [#tpu.dimension_semantics<parallel>, #tpu.dimension_semantics<arbitrary>], iteration_bounds = array<i64: 1, 1>, scalar_prefetch = 0 : i64, scratch_operands = 1 : i64, tpu.core_type = #tpu.core_type<tc>, window_params = [{transform_indices = @transform_0, window_bounds = array<i64: 16, 128>}, {transform_indices = @transform_1, window_bounds = array<i64: 128, 128>}, {transform_indices = @transform_2, window_bounds = array<i64: 1, 128>}, {transform_indices = @transform_3, window_bounds = array<i64: 128, 128>}, {pipeline_mode = #tpu.pipeline_mode<synchronous>, transform_indices = @transform_4, window_bounds = array<i64: 1, 128>}, {transform_indices = @transform_5, window_bounds = array<i64: 16, 128>}]} {
    %c0_i32 = arith.constant 0 : i32
    %0 = arith.cmpi eq, %arg1, %c0_i32 : i32
    %1 = arith.extui %0 : i1 to i32
    %c0_i32_0 = arith.constant 0 : i32
    %2 = arith.cmpi ne, %1, %c0_i32_0 : i32
    scf.if %2 {
      %cst_19 = arith.constant 0.000000e+00 : f32
      %30 = vector.broadcast %cst_19 : f32 to vector<16x128xf32>
      %c0_20 = arith.constant 0 : index
      %c0_21 = arith.constant 0 : index
      %31 = vector.load %arg8[%c0_20, %c0_21] : memref<16x128xf32, #tpu.memory_space<vmem>>, vector<16x128xf32>
      tpu.vector_store %arg8[%c0_20, %c0_21], %30 {strides = array<i32>} : memref<16x128xf32, #tpu.memory_space<vmem>>, vector<16x128xf32>,
    } else {
    }
    %c0 = arith.constant 0 : index
    %c0_1 = arith.constant 0 : index
    %3 = vector.load %arg2[%c0, %c0_1] : memref<16x128xf32, #tpu.memory_space<vmem>>, vector<16x128xf32>
    %c0_2 = arith.constant 0 : index
    %c0_3 = arith.constant 0 : index
    %4 = vector.load %arg3[%c0_2, %c0_3] : memref<128x128xf32, #tpu.memory_space<vmem>>, vector<128x128xf32>
    %cst = arith.constant dense<0.000000e+00> : vector<16x128xf32>
    %5 = tpu.matmul %3, %4, %cst {dimension_numbers = #tpu.dot_dimension_numbers<[1], [0], [0], [1], [0, 0, 1, 1], [], []>} : vector<16x128xf32>, vector<128x128xf32>, vector<16x128xf32> -> vector<16x128xf32>
    %c0_4 = arith.constant 0 : index
    %c0_5 = arith.constant 0 : index
    %6 = vector.load %arg4[%c0_4, %c0_5] : memref<1x128xf32, #tpu.memory_space<vmem>>, vector<1x128xf32>
    %7 = vector.broadcast %6 : vector<1x128xf32> to vector<16x128xf32>
    %8 = arith.addf %5, %7 : vector<16x128xf32>
    %cst_6 = arith.constant 5.000000e-01 : f32
    %9 = vector.broadcast %cst_6 : f32 to vector<16x128xf32>
    %10 = arith.mulf %9, %8 : vector<16x128xf32>
    %11 = arith.mulf %8, %8 : vector<16x128xf32>
    %12 = arith.mulf %11, %8 : vector<16x128xf32>
    %cst_7 = arith.constant 4.471500e-02 : f32
    %13 = vector.broadcast %cst_7 : f32 to vector<16x128xf32>
    %14 = arith.mulf %13, %12 : vector<16x128xf32>
    %15 = arith.addf %8, %14 : vector<16x128xf32>
    %cst_8 = arith.constant 0.797884583 : f32
    %16 = vector.broadcast %cst_8 : f32 to vector<16x128xf32>
    %17 = arith.mulf %16, %15 : vector<16x128xf32>
    %18 = math.tanh %17 : vector<16x128xf32>
    %cst_9 = arith.constant 1.000000e+00 : f32
    %19 = vector.broadcast %cst_9 : f32 to vector<16x128xf32>
    %20 = arith.addf %19, %18 : vector<16x128xf32>
    %21 = arith.mulf %10, %20 : vector<16x128xf32>
    %c0_10 = arith.constant 0 : index
    %c0_11 = arith.constant 0 : index
    %22 = vector.load %arg8[%c0_10, %c0_11] : memref<16x128xf32, #tpu.memory_space<vmem>>, vector<16x128xf32>
    %c0_12 = arith.constant 0 : index
    %c0_13 = arith.constant 0 : index
    %23 = vector.load %arg5[%c0_12, %c0_13] : memref<128x128xf32, #tpu.memory_space<vmem>>, vector<128x128xf32>
    %cst_14 = arith.constant dense<0.000000e+00> : vector<16x128xf32>
    %24 = tpu.matmul %21, %23, %cst_14 {dimension_numbers = #tpu.dot_dimension_numbers<[1], [0], [0], [1], [0, 0, 1, 1], [], []>} : vector<16x128xf32>, vector<128x128xf32>, vector<16x128xf32> -> vector<16x128xf32>
    %25 = arith.addf %22, %24 : vector<16x128xf32>
    %c0_15 = arith.constant 0 : index
    %c0_16 = arith.constant 0 : index
    %26 = vector.load %arg8[%c0_15, %c0_16] : memref<16x128xf32, #tpu.memory_space<vmem>>, vector<16x128xf32>
    tpu.vector_store %arg8[%c0_15, %c0_16], %25 {strides = array<i32>} : memref<16x128xf32, #tpu.memory_space<vmem>>, vector<16x128xf32>,
    %c0_i32_17 = arith.constant 0 : i32
    %27 = arith.cmpi eq, %arg1, %c0_i32_17 : i32
    %28 = arith.extui %27 : i1 to i32
    %c0_i32_18 = arith.constant 0 : i32
    %29 = arith.cmpi ne, %28, %c0_i32_18 : i32
    scf.if %29 {
      %c0_19 = arith.constant 0 : index
      %c0_20 = arith.constant 0 : index
      %30 = vector.load %arg8[%c0_19, %c0_20] : memref<16x128xf32, #tpu.memory_space<vmem>>, vector<16x128xf32>
      %c0_21 = arith.constant 0 : index
      %c0_22 = arith.constant 0 : index
      %31 = vector.load %arg6[%c0_21, %c0_22] : memref<1x128xf32, #tpu.memory_space<vmem>>, vector<1x128xf32>
      %32 = vector.broadcast %31 : vector<1x128xf32> to vector<16x128xf32>
      %33 = arith.addf %30, %32 : vector<16x128xf32>
      %c0_23 = arith.constant 0 : index
      %c0_24 = arith.constant 0 : index
      %34 = vector.load %arg7[%c0_23, %c0_24] : memref<16x128xf32, #tpu.memory_space<vmem>>, vector<16x128xf32>
      tpu.vector_store %arg7[%c0_23, %c0_24], %33 {strides = array<i32>} : memref<16x128xf32, #tpu.memory_space<vmem>>, vector<16x128xf32>,
    } else {
    }
    return
  }
  func.func @transform_0(%arg0: i32, %arg1: i32) -> (i32, i32) {
    %c0_i32 = arith.constant 0 : i32
    %c0_i32_0 = arith.constant 0 : i32
    return %arg0, %c0_i32 : i32, i32
  }
  func.func @transform_1(%arg0: i32, %arg1: i32) -> (i32, i32) {
    %c0_i32 = arith.constant 0 : i32
    %c0_i32_0 = arith.constant 0 : i32
    return %c0_i32, %arg1 : i32, i32
  }
  func.func @transform_2(%arg0: i32, %arg1: i32) -> (i32, i32) {
    %c0_i32 = arith.constant 0 : i32
    %c0_i32_0 = arith.constant 0 : i32
    return %c0_i32, %arg1 : i32, i32
  }
  func.func @transform_3(%arg0: i32, %arg1: i32) -> (i32, i32) {
    %c0_i32 = arith.constant 0 : i32
    %c0_i32_0 = arith.constant 0 : i32
    return %arg1, %c0_i32 : i32, i32
  }
  func.func @transform_4(%arg0: i32, %arg1: i32) -> (i32, i32) {
    %c0_i32 = arith.constant 0 : i32
    %c0_i32_0 = arith.constant 0 : i32
    %c0_i32_1 = arith.constant 0 : i32
    return %c0_i32, %c0_i32_0 : i32, i32
  }
  func.func @transform_5(%arg0: i32, %arg1: i32) -> (i32, i32) {
    %c0_i32 = arith.constant 0 : i32
    %c0_i32_0 = arith.constant 0 : i32
    return %arg0, %c0_i32 : i32, i32
  }
}

</mosaic_0001>

<llo_original>
// kernel: feed_forward.1
$region0: #{feed_forward.1}
  #allocation0 [shape = 'u32[]', space=smem, size = 0x4, offset = 0x4, fixed_abs, tag = 'smem constant byte address 0x4 - core index']
  #allocation1 [shape = 'u32[72,128]{1,0:T(1,128)}', space=vmem, size = 0x9000, scoped, tag = 'internal scratch']
  #allocation2 [shape = 'f32[16,128]{1,0:T(8,128)}', space=vmem, size = 0x2000, scoped, tag = 'scratch operand']
  %s0 = inlined_call_operand.vmem [shape: f32[16,128], index: 0, kind: input, shape index: {}]
  %s1 = inlined_call_operand.vmem [shape: f32[128,128], index: 1, kind: input, shape index: {}]
  %s2 = inlined_call_operand.vmem [shape: f32[1,128], index: 2, kind: input, shape index: {}]
  %s3 = inlined_call_operand.vmem [shape: f32[128,128], index: 3, kind: input, shape index: {}]
  %s4 = inlined_call_operand.vmem [shape: f32[1,128], index: 4, kind: input, shape index: {}]
  %s5 = inlined_call_operand.vmem [shape: f32[16,128], index: 5, kind: output, shape index: {}]
  %s6 = sld [smem:[#allocation0]]
  $region38: #{feed_forward.1} parent=0
    _
  %s8 = ssub.s32 1, %s6
  %s9 = scalar_select 0, %s8, %s6
  // Predicated region
  $region2: #{feed_forward.1} parent=0 // pred_check
    _
  $region3: #{feed_forward.1} parent=0 // pred_check_branch
    %11 = sbr.rel (0) target = $region5
  $region4: #{feed_forward.1} parent=0 // pred_region
    _
  $region5: #{feed_forward.1} parent=0 // pred_fallthru
    _
  // Predicated region
  $region6: #{feed_forward.1} parent=0 // pred_check
    _
  $region7: #{feed_forward.1} parent=0 // pred_check_branch
    %13 = sbr.rel (0) target = $region9
  $region8: #{feed_forward.1} parent=0 // pred_region
    _
  $region9: #{feed_forward.1} parent=0 // pred_fallthru
    _
  // Predicated region
  $region10: #{feed_forward.1} parent=0 // pred_check
    _
  $region11: #{feed_forward.1} parent=0 // pred_check_branch
    %15 = sbr.rel (0) target = $region13
  $region12: #{feed_forward.1} parent=0 // pred_region
    _
  $region13: #{feed_forward.1} parent=0 // pred_fallthru
    _
  // Predicated region
  $region14: #{feed_forward.1} parent=0 // pred_check
    _
  $region15: #{feed_forward.1} parent=0 // pred_check_branch
    %17 = sbr.rel (0) target = $region17
  $region16: #{feed_forward.1} parent=0 // pred_region
    _
  $region17: #{feed_forward.1} parent=0 // pred_fallthru
    _
  // Predicated region
  $region18: #{feed_forward.1} parent=0 // pred_check
    _
  $region19: #{feed_forward.1} parent=0 // pred_check_branch
    %19 = sbr.rel (0) target = $region21
  $region20: #{feed_forward.1} parent=0 // pred_region
    _
  $region21: #{feed_forward.1} parent=0 // pred_fallthru
    _
  %p20 = scmp.eq.s32.totalorder 0, 0
  // Predicated region
  $region22: #{feed_forward.1} parent=0 // pred_check
    %p21 = pneg %p20
  $region23: #{feed_forward.1} parent=0 // pred_check_branch
    %23 = sbr.rel (%p21) target = $region25
  $region24: #{feed_forward.1} parent=0 // pred_region
    %24 = vst [vmem:[#allocation2] sm:$0xff] 0.0
    %25 = vst [vmem:[#allocation2 + $0x8] sm:$0xff] 0.0
  $region25: #{feed_forward.1} parent=0 // pred_fallthru
    _
  %v26 = vld [vmem:[%s0] sm:$0xff]
  %v27 = vld [vmem:[%s0 + $0x8] sm:$0xff]
  %v28 = vld [vmem:[%s1] sm:$0xff]
  %v29 = vld [vmem:[%s1 + $0x8] sm:$0xff]
  %v30 = vld [vmem:[%s1 + $0x10] sm:$0xff]
  %v31 = vld [vmem:[%s1 + $0x18] sm:$0xff]
  %v32 = vld [vmem:[%s1 + $0x20] sm:$0xff]
  %v33 = vld [vmem:[%s1 + $0x28] sm:$0xff]
  %v34 = vld [vmem:[%s1 + $0x30] sm:$0xff]
  %v35 = vld [vmem:[%s1 + $0x38] sm:$0xff]
  %v36 = vld [vmem:[%s1 + $0x40] sm:$0xff]
  %v37 = vld [vmem:[%s1 + $0x48] sm:$0xff]
  %v38 = vld [vmem:[%s1 + $0x50] sm:$0xff]
  %v39 = vld [vmem:[%s1 + $0x58] sm:$0xff]
  %v40 = vld [vmem:[%s1 + $0x60] sm:$0xff]
  %v41 = vld [vmem:[%s1 + $0x68] sm:$0xff]
  %v42 = vld [vmem:[%s1 + $0x70] sm:$0xff]
  %v43 = vld [vmem:[%s1 + $0x78] sm:$0xff]
  %v44 = vld [vmem:[%s2] sm:$0x1]
  %v46 = vperm.slane %v44, 0
  %48 = vmatpush.msra.mxu0 %v43
  %49 = vmatpush.msra.mxu0 %v42
  %50 = vmatpush.msra.mxu0 %v41
  %51 = vmatpush.msra.mxu0 %v40
  %52 = vmatpush.msra.mxu0 %v39
  %53 = vmatpush.msra.mxu0 %v38
  %54 = vmatpush.msra.mxu0 %v37
  %55 = vmatpush.msra.mxu0 %v36
  %56 = vmatpush.msra.mxu0 %v35
  %57 = vmatpush.msra.mxu0 %v34
  %58 = vmatpush.msra.mxu0 %v33
  %59 = vmatpush.msra.mxu0 %v32
  %60 = vmatpush.msra.mxu0 %v31
  %61 = vmatpush.msra.mxu0 %v30
  %62 = vmatpush.msra.mxu0 %v29
  %63 = vmatpush.msra.mxu0 %v28
  %64 = vmatmul.f32.gmra.mxu0 %v26
  %v65 = vpop.f32.mrf.mxu0
  %v66 = vadd.f32 %v46, %v65
  %67 = vmatmul.f32.gmra.mxu0 %v27
  %v68 = vpop.f32.mrf.mxu0
  %v69 = vadd.f32 %v46, %v68
  %70 = vdwg.mxu0
  %v71 = vmul.f32 %v66, 0.5
  %v72 = vmul.f32 %v69, 0.5
  %v73 = vmul.f32 %v66, %v66
  %v74 = vmul.f32 %v69, %v69
  %v75 = vmul.f32 %v73, %v66
  %v76 = vmul.f32 %v74, %v69
  %v77 = vmul.f32 %v75, 0.044715
  %v78 = vmul.f32 %v76, 0.044715
  %v79 = vadd.f32 %v66, %v77
  %v80 = vadd.f32 %v69, %v78
  %v81 = vmul.f32 %v79, 0.7978846
  %v82 = vmul.f32 %v80, 0.7978846
  %v83 = vtanh.pop %v81
  %v84 = vtanh.pop %v82
  %v85 = vadd.f32 %v83, 1.0
  %v86 = vadd.f32 %v84, 1.0
  %v87 = vmul.f32 %v71, %v85
  %v88 = vmul.f32 %v72, %v86
  %v89 = vld [vmem:[#allocation2] sm:$0xff]
  %v90 = vld [vmem:[#allocation2 + $0x8] sm:$0xff]
  %v91 = vld [vmem:[%s3] sm:$0xff]
  %v92 = vld [vmem:[%s3 + $0x8] sm:$0xff]
  %v93 = vld [vmem:[%s3 + $0x10] sm:$0xff]
  %v94 = vld [vmem:[%s3 + $0x18] sm:$0xff]
  %v95 = vld [vmem:[%s3 + $0x20] sm:$0xff]
  %v96 = vld [vmem:[%s3 + $0x28] sm:$0xff]
  %v97 = vld [vmem:[%s3 + $0x30] sm:$0xff]
  %v98 = vld [vmem:[%s3 + $0x38] sm:$0xff]
  %v99 = vld [vmem:[%s3 + $0x40] sm:$0xff]
  %v100 = vld [vmem:[%s3 + $0x48] sm:$0xff]
  %v101 = vld [vmem:[%s3 + $0x50] sm:$0xff]
  %v102 = vld [vmem:[%s3 + $0x58] sm:$0xff]
  %v103 = vld [vmem:[%s3 + $0x60] sm:$0xff]
  %v104 = vld [vmem:[%s3 + $0x68] sm:$0xff]
  %v105 = vld [vmem:[%s3 + $0x70] sm:$0xff]
  %v106 = vld [vmem:[%s3 + $0x78] sm:$0xff]
  %107 = vmatpush.msra.mxu0 %v106
  %108 = vmatpush.msra.mxu0 %v105
  %109 = vmatpush.msra.mxu0 %v104
  %110 = vmatpush.msra.mxu0 %v103
  %111 = vmatpush.msra.mxu0 %v102
  %112 = vmatpush.msra.mxu0 %v101
  %113 = vmatpush.msra.mxu0 %v100
  %114 = vmatpush.msra.mxu0 %v99
  %115 = vmatpush.msra.mxu0 %v98
  %116 = vmatpush.msra.mxu0 %v97
  %117 = vmatpush.msra.mxu0 %v96
  %118 = vmatpush.msra.mxu0 %v95
  %119 = vmatpush.msra.mxu0 %v94
  %120 = vmatpush.msra.mxu0 %v93
  %121 = vmatpush.msra.mxu0 %v92
  %122 = vmatpush.msra.mxu0 %v91
  %123 = vmatmul.f32.gmra.mxu0 %v87
  %v124 = vpop.f32.mrf.mxu0
  %v125 = vadd.f32 0.0, %v124
  %126 = vmatmul.f32.gmra.mxu0 %v88
  %v127 = vpop.f32.mrf.mxu0
  %v128 = vadd.f32 0.0, %v127
  %129 = vdwg.mxu0
  %v130 = vadd.f32 %v89, %v125
  %v131 = vadd.f32 %v90, %v128
  %132 = vst [vmem:[#allocation2] sm:$0xff] %v130
  %133 = vst [vmem:[#allocation2 + $0x8] sm:$0xff] %v131
  // Predicated region
  $region26: #{feed_forward.1} parent=0 // pred_check
    %p134 = pneg %p20
  $region27: #{feed_forward.1} parent=0 // pred_check_branch
    %136 = sbr.rel (%p134) target = $region29
  $region28: #{feed_forward.1} parent=0 // pred_region
    %v137 = vld [vmem:[#allocation2] sm:$0xff]
    %v138 = vld [vmem:[#allocation2 + $0x8] sm:$0xff]
    %v139 = vld [vmem:[%s4] sm:$0x1]
    %v141 = vperm.slane %v139, 0
    %v143 = vadd.f32 %v137, %v141
    %v144 = vadd.f32 %v138, %v141
    %145 = vst [vmem:[%s5] sm:$0xff] %v143
    %146 = vst [vmem:[%s5 + $0x8] sm:$0xff] %v144
  $region29: #{feed_forward.1} parent=0 // pred_fallthru
    _
  // Predicated region
  $region30: #{feed_forward.1} parent=0 // pred_check
    _
  $region31: #{feed_forward.1} parent=0 // pred_check_branch
    %148 = sbr.rel (0) target = $region33
  $region32: #{feed_forward.1} parent=0 // pred_region
    _
  $region33: #{feed_forward.1} parent=0 // pred_fallthru
    _
  // Predicated region
  $region34: #{feed_forward.1} parent=0 // pred_check
    _
  $region35: #{feed_forward.1} parent=0 // pred_check_branch
    %150 = sbr.rel (0) target = $region37
  $region36: #{feed_forward.1} parent=0 // pred_region
    _
  $region37: #{feed_forward.1} parent=0 // pred_fallthru
    _

</llo_original>
